<compile_context>
chip_gen: v6e
topology: v6e:2x2x1
jax: 0.10.0
libtpu: 0.0.40
codegen_flags: <defaults>
</compile_context>

<pallas_src>
import functools

import jax
import jax.numpy as jnp
from jax.experimental import pallas as pl
from jax.experimental.pallas import tpu as pltpu

_LANES = 128
_COL_ALIGN = 1024                      # 8 sublane-blocks of 128 lanes
_VMEM_INPUT_BUDGET = 8 * 1024 * 1024   # double-buffered input blocks
_MAX_TILE_COLS = 256 * 1024            # ~3 MB/step HBM traffic at D=3, f32


def _round_up(x, m):
    return ((x + m - 1) // m) * m


def _tile_blocks(d, nb, n_streams, elem_bytes, tile_cols=None):
    """Pick the per-step tile size (in 128-column blocks) from a VMEM budget."""
    if tile_cols is None:
        per_col = max(1, d * elem_bytes * n_streams * 2)   # 2 = double buffering
        cols = min(_VMEM_INPUT_BUDGET // per_col, _MAX_TILE_COLS)
        cols = max(_COL_ALIGN, (cols // _COL_ALIGN) * _COL_ALIGN)
    else:
        assert tile_cols % _COL_ALIGN == 0
        cols = tile_cols
    tb = max(8, min(cols // _LANES, nb))   # nb and cols//128 are multiples of 8
    return tb


def _reduce_and_store(d, out_ref, nb_total, tb):
    """d: (D, TB, 128) f32 difference block -> (1, 1, 128) partial distance sum."""
    sq = jnp.sum(d * d, axis=0)        # (TB, 128), dense vreg adds over D
    dist = jnp.sqrt(sq)                # (TB, 128), dense EUP pushes

    i = pl.program_id(0)
    last = pl.num_programs(0) - 1

    @pl.when(i < last)
    def _():
        # Interior tiles: no masking work at all.
        out_ref[...] = jnp.sum(dist, axis=0, keepdims=True)[None]

    @pl.when(i == last)
    def _():
        # Tail tile only: zero out-of-bounds 128-column blocks (garbage rows of
        # a partial final block).  The lane tail (N..N_pad) is zero-padded in
        # XLA and contributes exactly 0, so block-row granularity suffices.
        row = jax.lax.broadcasted_iota(jnp.int32, dist.shape, 0) + i * tb
        masked = jnp.where(row < nb_total, dist, jnp.float32(0.0))
        out_ref[...] = jnp.sum(masked, axis=0, keepdims=True)[None]


def _l2mae_diff_kernel(diff_ref, out_ref, *, nb_total, tb):
    _reduce_and_store(diff_ref[...].astype(jnp.float32), out_ref, nb_total, tb)


def _l2mae_xy_kernel(x_ref, y_ref, out_ref, *, nb_total, tb):
    d = x_ref[...].astype(jnp.float32) - y_ref[...].astype(jnp.float32)
    _reduce_and_store(d, out_ref, nb_total, tb)


def _run(streams, kernel_body, n_rows, nb, d, reduction, tb):
    num_tiles = pl.cdiv(nb, tb)
    partials = pl.pallas_call(
        functools.partial(kernel_body, nb_total=nb, tb=tb),
        out_shape=jax.ShapeDtypeStruct((num_tiles, 1, _LANES), jnp.float32),
        grid_spec=pl.GridSpec(
            grid=(num_tiles,),
            in_specs=[
                pl.BlockSpec((d, tb, _LANES), lambda i: (0, i, 0))
                for _ in streams
            ],
            # One tiny independent partial per step -> no carried accumulator,
            # grid axis can be "parallel" (both TensorCores on v7x).
            out_specs=pl.BlockSpec((1, 1, _LANES), lambda i: (i, 0, 0)),
        ),
        compiler_params=pltpu.CompilerParams(
            dimension_semantics=("parallel",),
            vmem_limit_bytes=32 * 1024 * 1024,
        ),
    )(*streams)
    total = jnp.sum(partials)          # num_tiles * 128 values: trivial in XLA
    if reduction == "mean":
        return total / jnp.float32(n_rows)
    return total


@functools.partial(jax.jit, static_argnames=("reduction", "tile_cols"))
def l2mae_loss(inp, target, *, reduction="mean", tile_cols=None):
    """Pallas TPU implementation of L2MAELoss.forward for [..., D] inputs.

    The difference is computed once in XLA (upcast -> subtract -> transpose ->
    zero-pad, ~one fused HBM pass) and a single f32 [D, N_pad] stream is fed to
    the kernel.  Callers that already hold channels-first data should use
    `l2mae_loss_channels_first` (no extra HBM pass at all).
    """
    assert reduction in ("mean", "sum")
    assert inp.shape == target.shape

    d = inp.shape[-1]
    x2 = inp.reshape(-1, d)
    y2 = target.reshape(-1, d)
    n = x2.shape[0]

    # Single fused XLA pass: upcast, subtract (in f32, matching the reference
    # semantics for low-precision inputs), transpose, zero-pad.
    diff_t = (x2.astype(jnp.float32) - y2.astype(jnp.float32)).T   # (D, N)
    n_pad = _round_up(n, _COL_ALIGN)
    if n_pad != n:
        diff_t = jnp.pad(diff_t, ((0, 0), (0, n_pad - n)))
    nb = n_pad // _LANES
    diff3 = diff_t.reshape(d, nb, _LANES)                          # free reshape

    tb = _tile_blocks(d, nb, n_streams=1, elem_bytes=4, tile_cols=tile_cols)
    return _run([diff3], _l2mae_diff_kernel, n, nb, d, reduction, tb)


@functools.partial(jax.jit, static_argnames=("reduction", "tile_cols"))
def l2mae_loss_channels_first(x_dn, y_dn, *, reduction="mean", tile_cols=None):
    """Fast path: inputs already [D, N] (norm over axis 0, reduce over axis 1).

    No transpose / diff pass: the two native-dtype streams go straight to the
    kernel (subtract happens after the in-kernel f32 upcast).  Zero-copy when
    N is a multiple of 1024; otherwise a small zero-pad copy is made.
    """
    assert reduction in ("mean", "sum")
    assert x_dn.shape == y_dn.shape and x_dn.ndim == 2

    d, n = x_dn.shape
    n_pad = _round_up(n, _COL_ALIGN)
    if n_pad != n:
        # TODO(synk): mask the ragged lane tail in-kernel instead of padding so
        # this path is copy-free for every N.
        x_dn = jnp.pad(x_dn, ((0, 0), (0, n_pad - n)))
        y_dn = jnp.pad(y_dn, ((0, 0), (0, n_pad - n)))
    nb = n_pad // _LANES
    x3 = x_dn.reshape(d, nb, _LANES)
    y3 = y_dn.reshape(d, nb, _LANES)

    eb = jnp.dtype(x_dn.dtype).itemsize
    tb = _tile_blocks(d, nb, n_streams=2, elem_bytes=eb, tile_cols=tile_cols)
    return _run([x3, y3], _l2mae_xy_kernel, n, nb, d, reduction, tb)


def _reference(inp, target, reduction="mean"):
    dists = jnp.linalg.norm(
        inp.astype(jnp.float32) - target.astype(jnp.float32), axis=-1
    )
    return jnp.mean(dists) if reduction == "mean" else jnp.sum(dists)


if __name__ == "__main__":
    key = jax.random.PRNGKey(0)
    k1, k2 = jax.random.split(key)

    failures = []

    def check(name, out, ref, rtol=1e-5, atol=1e-6):
        out = jax.block_until_ready(out)
        ref = jax.block_until_ready(ref)
        if not jnp.allclose(out, ref, rtol=rtol, atol=atol):
            failures.append(f"{name}: kernel={out} ref={ref}")

    # Small, module-consistent shapes: N rows x D=3 components (e.g. forces).
    N, D = 200, 3
    inp = jax.random.normal(k1, (N, D), dtype=jnp.float32)
    target = jax.random.normal(k2, (N, D), dtype=jnp.float32)

    for reduction in ("mean", "sum"):
        check(f"f32 {reduction}",
              l2mae_loss(inp, target, reduction=reduction),
              _reference(inp, target, reduction))

    # Batched leading dims ([..., D] semantics).
    inp_b = inp.reshape(2, 100, D)
    tgt_b = target.reshape(2, 100, D)
    check("f32 batched mean",
          l2mae_loss(inp_b, tgt_b, reduction="mean"),
          _reference(inp_b, tgt_b, "mean"))

    # Multi-tile + ragged grid tail: tile_cols=2048 -> tb=16 blocks over nb=24,
    # so the last tile has out-of-bounds sublane rows exercised by the mask.
    N2 = 2500
    k3, k4 = jax.random.split(k2)
    inp2 = jax.random.normal(k3, (N2, D), dtype=jnp.float32)
    tgt2 = jax.random.normal(k4, (N2, D), dtype=jnp.float32)
    for reduction in ("mean", "sum"):
        check(f"f32 ragged multi-tile {reduction}",
              l2mae_loss(inp2, tgt2, reduction=reduction, tile_cols=2048),
              _reference(inp2, tgt2, reduction))

    # bf16 inputs (upcast to f32 before the subtract, matching the reference).
    inp_bf = inp.astype(jnp.bfloat16)
    tgt_bf = target.astype(jnp.bfloat16)
    check("bf16 mean",
          l2mae_loss(inp_bf, tgt_bf, reduction="mean"),
          _reference(inp_bf, tgt_bf, "mean"), rtol=1e-4, atol=1e-4)

    # Channels-first ([D, N]) fast path: no transpose / diff pass at all.
    x_dn, y_dn = inp2.T, tgt2.T
    check("channels-first f32 mean",
          l2mae_loss_channels_first(x_dn, y_dn, reduction="mean"),
          _reference(inp2, tgt2, "mean"))
    check("channels-first bf16 sum",
          l2mae_loss_channels_first(x_dn.astype(jnp.bfloat16),
                                    y_dn.astype(jnp.bfloat16), reduction="sum"),
          _reference(inp2.astype(jnp.bfloat16), tgt2.astype(jnp.bfloat16), "sum"),
          rtol=1e-4, atol=1e-3)

    if failures:
        for f in failures:
            print("MISMATCH", f)
    else:
        print("KERNEL_OK")
</pallas_src>

<mosaic_0001>
module attributes {stable_mosaic.version = 11 : i64} {
  func.func @_l2mae_diff_kernel(%arg0: i32, %arg1: memref<3x8x128xf32, #tpu.memory_space<vmem>>, %arg2: memref<1x1x128xf32, #tpu.memory_space<vmem>>) attributes {dimension_semantics = [#tpu.dimension_semantics<parallel>], iteration_bounds = array<i64: 1>, scalar_prefetch = 0 : i64, scratch_operands = 0 : i64, tpu.core_type = #tpu.core_type<tc>, window_params = [{transform_indices = @transform_0, window_bounds = array<i64: 3, 8, 128>}, {transform_indices = @transform_1, window_bounds = array<i64: 1, 1, 128>}]} {
    %c0 = arith.constant 0 : index
    %c0_0 = arith.constant 0 : index
    %c0_1 = arith.constant 0 : index
    %0 = vector.load %arg1[%c0, %c0_0, %c0_1] : memref<3x8x128xf32, #tpu.memory_space<vmem>>, vector<3x8x128xf32>
    %1 = arith.mulf %0, %0 : vector<3x8x128xf32>
    %cst = arith.constant dense<0.000000e+00> : vector<8x128xf32>
    %2 = vector.multi_reduction <add>, %1, %cst [0] : vector<3x8x128xf32> to vector<8x128xf32>
    %3 = math.sqrt %2 : vector<8x128xf32>
    %c0_i32 = arith.constant 0 : i32
    %4 = arith.cmpi slt, %arg0, %c0_i32 : i32
    %5 = arith.extui %4 : i1 to i32
    %c0_i32_2 = arith.constant 0 : i32
    %6 = arith.cmpi ne, %5, %c0_i32_2 : i32
    scf.if %6 {
      %cst_5 = arith.constant dense<0.000000e+00> : vector<128xf32>
      %10 = vector.multi_reduction <add>, %3, %cst_5 [0] : vector<8x128xf32> to vector<128xf32>
      %11 = vector.shape_cast %10 : vector<128xf32> to vector<1x128xf32>
      %12 = vector.shape_cast %11 : vector<1x128xf32> to vector<1x1x128xf32>
      %c0_6 = arith.constant 0 : index
      %c0_7 = arith.constant 0 : index
      %c0_8 = arith.constant 0 : index
      %13 = vector.load %arg2[%c0_6, %c0_7, %c0_8] : memref<1x1x128xf32, #tpu.memory_space<vmem>>, vector<1x1x128xf32>
      tpu.vector_store %arg2[%c0_6, %c0_7, %c0_8], %12 {strides = array<i32>} : memref<1x1x128xf32, #tpu.memory_space<vmem>>, vector<1x1x128xf32>,
    } else {
    }
    %c0_i32_3 = arith.constant 0 : i32
    %7 = arith.cmpi eq, %arg0, %c0_i32_3 : i32
    %8 = arith.extui %7 : i1 to i32
    %c0_i32_4 = arith.constant 0 : i32
    %9 = arith.cmpi ne, %8, %c0_i32_4 : i32
    scf.if %9 {
      %10 = tpu.iota {dimensions = array<i32: 0>} : vector<8x128xi32>
      %c8_i32 = arith.constant 8 : i32
      %11 = arith.muli %arg0, %c8_i32 : i32
      %12 = vector.broadcast %11 : i32 to vector<8x128xi32>
      %13 = arith.addi %10, %12 : vector<8x128xi32>
      %c8_i32_5 = arith.constant 8 : i32
      %14 = vector.broadcast %c8_i32_5 : i32 to vector<8x128xi32>
      %15 = arith.cmpi slt, %13, %14 : vector<8x128xi32>
      %cst_6 = arith.constant 0.000000e+00 : f32
      %16 = vector.broadcast %cst_6 : f32 to vector<8x128xf32>
      %17 = arith.select %15, %3, %16 : vector<8x128xi1>, vector<8x128xf32>
      %cst_7 = arith.constant dense<0.000000e+00> : vector<128xf32>
      %18 = vector.multi_reduction <add>, %17, %cst_7 [0] : vector<8x128xf32> to vector<128xf32>
      %19 = vector.shape_cast %18 : vector<128xf32> to vector<1x128xf32>
      %20 = vector.shape_cast %19 : vector<1x128xf32> to vector<1x1x128xf32>
      %c0_8 = arith.constant 0 : index
      %c0_9 = arith.constant 0 : index
      %c0_10 = arith.constant 0 : index
      %21 = vector.load %arg2[%c0_8, %c0_9, %c0_10] : memref<1x1x128xf32, #tpu.memory_space<vmem>>, vector<1x1x128xf32>
      tpu.vector_store %arg2[%c0_8, %c0_9, %c0_10], %20 {strides = array<i32>} : memref<1x1x128xf32, #tpu.memory_space<vmem>>, vector<1x1x128xf32>,
    } else {
    }
    return
  }
  func.func @transform_0(%arg0: i32) -> (i32, i32, i32) {
    %c0_i32 = arith.constant 0 : i32
    %c0_i32_0 = arith.constant 0 : i32
    %c0_i32_1 = arith.constant 0 : i32
    return %c0_i32, %arg0, %c0_i32_0 : i32, i32, i32
  }
  func.func @transform_1(%arg0: i32) -> (i32, i32, i32) {
    %c0_i32 = arith.constant 0 : i32
    %c0_i32_0 = arith.constant 0 : i32
    %c0_i32_1 = arith.constant 0 : i32
    return %arg0, %c0_i32, %c0_i32_0 : i32, i32, i32
  }
}

</mosaic_0001>

<llo_original>
// kernel: l2mae_loss.1
$region0: #{l2mae_loss.1}
  #allocation0 [shape = 'u32[]', space=smem, size = 0x4, offset = 0x4, fixed_abs, tag = 'smem constant byte address 0x4 - core index']
  #allocation1 [shape = 'u32[144,128]{1,0:T(1,128)}', space=vmem, size = 0x12000, scoped, tag = 'internal scratch']
  %s0 = inlined_call_operand.vmem [shape: f32[3,8,128], index: 0, kind: input, shape index: {}]
  %s1 = inlined_call_operand.vmem [shape: f32[1,1,128], index: 1, kind: output, shape index: {}]
  %s2 = sld [smem:[#allocation0]]
  $region22: #{l2mae_loss.1} parent=0
    _
  %s4 = ssub.s32 1, %s2
  %s5 = scalar_select 0, %s4, %s2
  // Predicated region
  $region2: #{l2mae_loss.1} parent=0 // pred_check
    _
  $region3: #{l2mae_loss.1} parent=0 // pred_check_branch
    %7 = sbr.rel (0) target = $region5
  $region4: #{l2mae_loss.1} parent=0 // pred_region
    _
  $region5: #{l2mae_loss.1} parent=0 // pred_fallthru
    _
  %v8 = vld [vmem:[%s0] sm:$0xff]
  %v9 = vld [vmem:[%s0 + $0x8] sm:$0xff]
  %v10 = vld [vmem:[%s0 + $0x10] sm:$0xff]
  %v11 = vmul.f32 %v8, %v8
  %v12 = vmul.f32 %v9, %v9
  %v13 = vmul.f32 %v10, %v10
  %v14 = vadd.f32 %v11, %v12
  %v15 = vadd.f32 %v14, %v13
  %v16 = vrsqrt.pop %v15
  %v17 = vmul.f32 %v15, %v16
  %vm18 = vcmp.eq.f32.partialorder %v15, inf
  %v19 = vsel %vm18, %v15, %v17
  %vm20 = vcmp.eq.f32.partialorder %v15, 0.0
  %v21 = vand.u32 %v15, 2147483648
  %v22 = vsel %vm20, %v21, %v19
  %p23 = scmp.lt.s32.totalorder 0, 0
  // Predicated region
  $region6: #{l2mae_loss.1} parent=0 // pred_check
    %p24 = pneg %p23
  $region7: #{l2mae_loss.1} parent=0 // pred_check_branch
    %26 = sbr.rel (%p24) target = $region9
  $region8: #{l2mae_loss.1} parent=0 // pred_region
    %v27 = vrot.slane %v22, 4
    %v28 = vadd.f32 %v22, %v27
    %v29 = vrot.slane %v28, 2
    %v30 = vadd.f32 %v28, %v29
    %v31 = vrot.slane %v30, 1
    %v32 = vadd.f32 %v30, %v31
    %33 = vst [vmem:[%s1] sm:$0x1] %v32
  $region9: #{l2mae_loss.1} parent=0 // pred_fallthru
    _
  %p34 = scmp.eq.s32.totalorder 0, 0
  // Predicated region
  $region10: #{l2mae_loss.1} parent=0 // pred_check
    %p35 = pneg %p34
  $region11: #{l2mae_loss.1} parent=0 // pred_check_branch
    %37 = sbr.rel (%p35) target = $region13
  $region12: #{l2mae_loss.1} parent=0 // pred_region
    %v38 = vlaneseq
    %v39 = vshrl.u32 %v38, 7
    %s40 = smul.u32 0, 8
    %v41 = vstv %s40
    %v42 = vadd.s32 %v39, %v41
    %vm43 = vcmp.lt.s32.totalorder %v42, 8
    %v44 = vsel %vm43, %v22, 0.0
    %v45 = vrot.slane %v44, 4
    %v46 = vadd.f32 %v44, %v45
    %v47 = vrot.slane %v46, 2
    %v48 = vadd.f32 %v46, %v47
    %v49 = vrot.slane %v48, 1
    %v50 = vadd.f32 %v48, %v49
    %51 = vst [vmem:[%s1] sm:$0x1] %v50
  $region13: #{l2mae_loss.1} parent=0 // pred_fallthru
    _
  // Predicated region
  $region14: #{l2mae_loss.1} parent=0 // pred_check
    _
  $region15: #{l2mae_loss.1} parent=0 // pred_check_branch
    %53 = sbr.rel (0) target = $region17
  $region16: #{l2mae_loss.1} parent=0 // pred_region
    _
  $region17: #{l2mae_loss.1} parent=0 // pred_fallthru
    _
  // Predicated region
  $region18: #{l2mae_loss.1} parent=0 // pred_check
    _
  $region19: #{l2mae_loss.1} parent=0 // pred_check_branch
    %55 = sbr.rel (0) target = $region21
  $region20: #{l2mae_loss.1} parent=0 // pred_region
    _
  $region21: #{l2mae_loss.1} parent=0 // pred_fallthru
    _

</llo_original>
